<compile_context>
chip_gen: v7x
topology: tpu7x:2x2x1
jax: 0.10.0
libtpu: 0.0.40
codegen_flags: <defaults>
</compile_context>

<pallas_src>
import jax
import jax.numpy as jnp
from jax import lax
from jax.experimental import pallas as pl
from jax.experimental.pallas import tpu as pltpu


def _cwmp_kernel(xw_ref, o_ref):
    # xw_ref: (C, K, TP) f32 — x_win[c, k, p]: channel c, k-th (row-major)
    #                          element of pooling window p (window chunk).
    # o_ref:  (C, C, TP)     — o[c, c2, p] = x[c2, argmax location of (c, p)].
    xw = xw_ref[...].astype(jnp.float32)              # (C, K, TP)
    C, K, TP = xw.shape

    # Per-(channel, window) max and first (row-major) in-window argmax.
    pooled = jnp.max(xw, axis=1, keepdims=True)       # (C, 1, TP)
    k_iota = lax.broadcasted_iota(jnp.int32, (C, K, TP), 1)
    kidx = jnp.min(jnp.where(xw == pooled, k_iota, K), axis=1)   # (C, TP) int32

    # Local cross-channel gather: out[c, c2, p] = xw[c2, kidx[c, p], p].
    # Exact f32 where-select (no multiply => +/-inf safe), unrolled over the
    # small static window size K; at most two (C, C, TP) arrays live at once.
    acc = jnp.zeros((C, C, TP), jnp.float32)
    for k in range(K):
        sel = (kidx == k)[:, None, :]                 # (C, 1, TP)
        acc = jnp.where(sel, xw[None, :, k, :], acc)  # (C, C2, TP)

    o_ref[...] = acc.astype(o_ref.dtype)


def _tpu_vmem_and_cores():
    """Best-effort query of per-core VMEM capacity and TensorCore count."""
    vmem_bytes = 64 * 1024 * 1024          # conservative default (v7x per-TC)
    num_cores = 1
    try:
        info = pltpu.get_tpu_info()
        vmem_bytes = int(getattr(info, "vmem_capacity_bytes", vmem_bytes))
        for attr in ("num_cores", "core_count", "num_tensorcores",
                     "tensorcores_per_chip"):
            val = getattr(info, attr, None)
            if val:
                num_cores = int(val)
                break
    except Exception:
        pass
    return vmem_bytes, num_cores


def _pick_window_tile(P, C, K, out_bytes, vmem_budget, prefer_split):
    """Largest window-chunk TP (divisor of P; lane-aligned unless TP == P)
    whose real per-step VMEM footprint fits the budget."""
    valid = [tp for tp in range(1, P + 1)
             if P % tp == 0 and (tp == P or tp % 128 == 0)]

    def footprint(tp):
        f32 = 4
        x_blk = C * K * tp * f32                               # input block
        o_blk = C * C * tp * out_bytes                         # output block
        temps = (3 * C * K * tp + 2 * C * C * tp + C * tp) * f32  # live temps
        return 2 * x_blk + 2 * o_blk + temps                   # 2x: double buffer

    fitting = [tp for tp in valid if footprint(tp) <= vmem_budget]
    tp = max(fitting) if fitting else min(valid)
    if prefer_split and tp == P:               # multi-TC chip with B == 1:
        smaller = [t for t in (fitting or valid) if t < P]     # give megacore
        if smaller:                                            # >= 2 grid steps
            tp = max(smaller)
    return tp


def channel_wise_max_pool_with_crossinfo(x, kernel_size, stride=None, out_dtype=None):
    """JAX/Pallas equivalent of ChannelWiseMaxPoolWithCrossInfo.forward."""
    if stride is None:
        stride = kernel_size
    kh, kw = (kernel_size, kernel_size) if isinstance(kernel_size, int) else tuple(kernel_size)
    sh, sw = (stride, stride) if isinstance(stride, int) else tuple(stride)

    B, C, H, W = x.shape
    Ph = (H - kh) // sh + 1
    Pw = (W - kw) // sw + 1
    P, K = Ph * Pw, kh * kw
    out_dtype = x.dtype if out_dtype is None else jnp.dtype(out_dtype)

    xf = x.astype(jnp.float32)

    # ---- wrapper-side window extraction (pure XLA glue, no bias stream) ----
    # x_win[b, c, k, p] = value of channel c at the k-th (row-major) element of
    # pooling window p.
    if sh == kh and sw == kw:
        # Non-overlapping default: crop + reshape/transpose only (no gather).
        xc = xf[:, :, :Ph * kh, :Pw * kw]
        x_win = (xc.reshape(B, C, Ph, kh, Pw, kw)
                   .transpose(0, 1, 3, 5, 2, 4)                # [b, c, r, q, ph, pw]
                   .reshape(B, C, K, P))
    else:
        # General strided / overlapping case: static index table + XLA gather.
        rows = jnp.arange(Ph)[:, None] * sh + jnp.arange(kh)[None, :]   # (Ph, kh)
        cols = jnp.arange(Pw)[:, None] * sw + jnp.arange(kw)[None, :]   # (Pw, kw)
        src = rows[:, :, None, None] * W + cols[None, None, :, :]       # (Ph,kh,Pw,kw)
        src = jnp.transpose(src, (1, 3, 0, 2)).reshape(K * P)           # [r,q,ph,pw]
        x_win = jnp.take(xf.reshape(B, C, H * W), src, axis=2).reshape(B, C, K, P)

    # ---- chip-aware VMEM budget & window-chunk tiling -----------------------
    vmem_bytes, num_cores = _tpu_vmem_and_cores()
    vmem_limit = int(max(32 * 1024 * 1024,
                         min(vmem_bytes * 3 // 4, 112 * 1024 * 1024)))
    TP = _pick_window_tile(P, C, K, jnp.dtype(out_dtype).itemsize,
                           vmem_budget=vmem_limit // 2,
                           prefer_split=(B == 1 and num_cores >= 2))
    NPC = P // TP

    out = pl.pallas_call(
        _cwmp_kernel,
        out_shape=jax.ShapeDtypeStruct((B, C, C, P), out_dtype),
        grid_spec=pltpu.PrefetchScalarGridSpec(
            num_scalar_prefetch=0,
            grid=(B, NPC),
            in_specs=[pl.BlockSpec((None, C, K, TP), lambda b, pc: (b, 0, 0, pc))],
            out_specs=pl.BlockSpec((None, C, C, TP), lambda b, pc: (b, 0, 0, pc)),
        ),
        compiler_params=pltpu.CompilerParams(
            dimension_semantics=("parallel", "parallel"),
            vmem_limit_bytes=vmem_limit,
        ),
    )(x_win)

    # Torch glue: out[b, c, c2, p] = x[b, c2, argmax(b, c, p)];
    # permute(0, 2, 1, 3).contiguous().view(B, C, C, P) is a raw
    # reinterpretation of the contiguous (B, P, C, C2) buffer.
    out = jnp.transpose(out, (0, 3, 1, 2))       # (B, P, C, C2)
    return out.reshape(B, C, C, P)


if __name__ == "__main__":
    import numpy as np

    def _numpy_ref(xn, kh, kw, sh, sw):
        B, C, H, W = xn.shape
        Ph = (H - kh) // sh + 1
        Pw = (W - kw) // sw + 1
        P = Ph * Pw
        Tp = np.zeros((B, P, C, C), np.float32)
        for b in range(B):
            for c in range(C):
                for i in range(Ph):
                    for j in range(Pw):
                        win = xn[b, c, i * sh:i * sh + kh, j * sw:j * sw + kw]
                        r, q = np.unravel_index(np.argmax(win), win.shape)
                        Tp[b, i * Pw + j, c, :] = xn[b, :, i * sh + r, j * sw + q]
        return Tp.reshape(B, C, C, P)

    k0, k1 = jax.random.split(jax.random.PRNGKey(0), 2)

    # Default (non-overlapping) path: kernel_size = stride = 2.
    x = jax.random.normal(k0, (2, 4, 16, 16), dtype=jnp.float32)
    out = jax.block_until_ready(
        channel_wise_max_pool_with_crossinfo(x, kernel_size=2, stride=2))
    assert out.shape == (2, 4, 4, 64), out.shape
    np.testing.assert_allclose(np.asarray(out),
                               _numpy_ref(np.asarray(x), 2, 2, 2, 2),
                               rtol=1e-6, atol=1e-6)

    # General (overlapping / strided) path: kernel_size = 3, stride = 2.
    x2 = jax.random.normal(k1, (2, 3, 9, 9), dtype=jnp.float32)
    out2 = jax.block_until_ready(
        channel_wise_max_pool_with_crossinfo(x2, kernel_size=3, stride=2))
    assert out2.shape == (2, 3, 3, 16), out2.shape
    np.testing.assert_allclose(np.asarray(out2),
                               _numpy_ref(np.asarray(x2), 3, 3, 2, 2),
                               rtol=1e-6, atol=1e-6)

    print("KERNEL_OK")
</pallas_src>

<mosaic_0001>
module attributes {stable_mosaic.version = 11 : i64} {
  func.func @_cwmp_kernel(%arg0: i32, %arg1: i32, %arg2: memref<1x4x4x64xf32, #tpu.memory_space<vmem>>, %arg3: memref<1x4x4x64xf32, #tpu.memory_space<vmem>>) attributes {dimension_semantics = [#tpu.dimension_semantics<parallel>, #tpu.dimension_semantics<parallel>], iteration_bounds = array<i64: 2, 1>, scalar_prefetch = 0 : i64, scratch_operands = 0 : i64, tpu.core_type = #tpu.core_type<tc>, window_params = [{transform_indices = @transform_0, window_bounds = array<i64: 1, 4, 4, 64>}, {transform_indices = @transform_1, window_bounds = array<i64: 1, 4, 4, 64>}]} {
    %c0 = arith.constant 0 : index
    %c0_0 = arith.constant 0 : index
    %c0_1 = arith.constant 0 : index
    %c0_2 = arith.constant 0 : index
    %0 = vector.load %arg2[%c0, %c0_0, %c0_1, %c0_2] : memref<1x4x4x64xf32, #tpu.memory_space<vmem>>, vector<1x4x4x64xf32>
    %1 = vector.shape_cast %0 : vector<1x4x4x64xf32> to vector<4x4x64xf32>
    %cst = arith.constant dense<0xFF800000> : vector<4x64xf32>
    %2 = vector.multi_reduction <maximumf>, %1, %cst [1] : vector<4x4x64xf32> to vector<4x64xf32>
    %3 = vector.shape_cast %2 : vector<4x64xf32> to vector<4x1x64xf32>
    %4 = tpu.iota {dimensions = array<i32: 1>} : vector<4x4x64xi32>
    %5 = vector.broadcast %3 : vector<4x1x64xf32> to vector<4x4x64xf32>
    %6 = arith.cmpf oeq, %1, %5 : vector<4x4x64xf32>
    %c4_i32 = arith.constant 4 : i32
    %7 = vector.broadcast %c4_i32 : i32 to vector<4x4x64xi32>
    %8 = arith.select %6, %4, %7 : vector<4x4x64xi1>, vector<4x4x64xi32>
    %cst_3 = arith.constant dense<2147483647> : vector<4x64xi32>
    %9 = vector.multi_reduction <minsi>, %8, %cst_3 [1] : vector<4x4x64xi32> to vector<4x64xi32>
    %cst_4 = arith.constant 0.000000e+00 : f32
    %10 = vector.broadcast %cst_4 : f32 to vector<4x4x64xf32>
    %c0_i32 = arith.constant 0 : i32
    %11 = vector.broadcast %c0_i32 : i32 to vector<4x64xi32>
    %12 = arith.cmpi eq, %9, %11 : vector<4x64xi32>
    %13 = vector.shape_cast %12 : vector<4x64xi1> to vector<4x1x64xi1>
    %14 = vector.extract_strided_slice %1 {offsets = [0, 0, 0], sizes = [4, 1, 64], strides = [1, 1, 1]} : vector<4x4x64xf32> to vector<4x1x64xf32>
    %15 = vector.shape_cast %14 : vector<4x1x64xf32> to vector<4x64xf32>
    %16 = vector.shape_cast %15 : vector<4x64xf32> to vector<1x4x64xf32>
    %17 = vector.shape_cast %13 : vector<4x1x64xi1> to vector<4x1x64xi1>
    %18 = vector.broadcast %17 : vector<4x1x64xi1> to vector<4x4x64xi1>
    %19 = vector.shape_cast %16 : vector<1x4x64xf32> to vector<1x4x64xf32>
    %20 = vector.broadcast %19 : vector<1x4x64xf32> to vector<4x4x64xf32>
    %21 = arith.select %18, %20, %10 : vector<4x4x64xi1>, vector<4x4x64xf32>
    %c1_i32 = arith.constant 1 : i32
    %22 = vector.broadcast %c1_i32 : i32 to vector<4x64xi32>
    %23 = arith.cmpi eq, %9, %22 : vector<4x64xi32>
    %24 = vector.shape_cast %23 : vector<4x64xi1> to vector<4x1x64xi1>
    %25 = vector.extract_strided_slice %1 {offsets = [0, 1, 0], sizes = [4, 1, 64], strides = [1, 1, 1]} : vector<4x4x64xf32> to vector<4x1x64xf32>
    %26 = vector.shape_cast %25 : vector<4x1x64xf32> to vector<4x64xf32>
    %27 = vector.shape_cast %26 : vector<4x64xf32> to vector<1x4x64xf32>
    %28 = vector.shape_cast %24 : vector<4x1x64xi1> to vector<4x1x64xi1>
    %29 = vector.broadcast %28 : vector<4x1x64xi1> to vector<4x4x64xi1>
    %30 = vector.shape_cast %27 : vector<1x4x64xf32> to vector<1x4x64xf32>
    %31 = vector.broadcast %30 : vector<1x4x64xf32> to vector<4x4x64xf32>
    %32 = arith.select %29, %31, %21 : vector<4x4x64xi1>, vector<4x4x64xf32>
    %c2_i32 = arith.constant 2 : i32
    %33 = vector.broadcast %c2_i32 : i32 to vector<4x64xi32>
    %34 = arith.cmpi eq, %9, %33 : vector<4x64xi32>
    %35 = vector.shape_cast %34 : vector<4x64xi1> to vector<4x1x64xi1>
    %36 = vector.extract_strided_slice %1 {offsets = [0, 2, 0], sizes = [4, 1, 64], strides = [1, 1, 1]} : vector<4x4x64xf32> to vector<4x1x64xf32>
    %37 = vector.shape_cast %36 : vector<4x1x64xf32> to vector<4x64xf32>
    %38 = vector.shape_cast %37 : vector<4x64xf32> to vector<1x4x64xf32>
    %39 = vector.shape_cast %35 : vector<4x1x64xi1> to vector<4x1x64xi1>
    %40 = vector.broadcast %39 : vector<4x1x64xi1> to vector<4x4x64xi1>
    %41 = vector.shape_cast %38 : vector<1x4x64xf32> to vector<1x4x64xf32>
    %42 = vector.broadcast %41 : vector<1x4x64xf32> to vector<4x4x64xf32>
    %43 = arith.select %40, %42, %32 : vector<4x4x64xi1>, vector<4x4x64xf32>
    %c3_i32 = arith.constant 3 : i32
    %44 = vector.broadcast %c3_i32 : i32 to vector<4x64xi32>
    %45 = arith.cmpi eq, %9, %44 : vector<4x64xi32>
    %46 = vector.shape_cast %45 : vector<4x64xi1> to vector<4x1x64xi1>
    %47 = vector.extract_strided_slice %1 {offsets = [0, 3, 0], sizes = [4, 1, 64], strides = [1, 1, 1]} : vector<4x4x64xf32> to vector<4x1x64xf32>
    %48 = vector.shape_cast %47 : vector<4x1x64xf32> to vector<4x64xf32>
    %49 = vector.shape_cast %48 : vector<4x64xf32> to vector<1x4x64xf32>
    %50 = vector.shape_cast %46 : vector<4x1x64xi1> to vector<4x1x64xi1>
    %51 = vector.broadcast %50 : vector<4x1x64xi1> to vector<4x4x64xi1>
    %52 = vector.shape_cast %49 : vector<1x4x64xf32> to vector<1x4x64xf32>
    %53 = vector.broadcast %52 : vector<1x4x64xf32> to vector<4x4x64xf32>
    %54 = arith.select %51, %53, %43 : vector<4x4x64xi1>, vector<4x4x64xf32>
    %c0_5 = arith.constant 0 : index
    %c0_6 = arith.constant 0 : index
    %c0_7 = arith.constant 0 : index
    %c0_8 = arith.constant 0 : index
    %55 = vector.load %arg3[%c0_5, %c0_6, %c0_7, %c0_8] : memref<1x4x4x64xf32, #tpu.memory_space<vmem>>, vector<1x4x4x64xf32>
    %56 = vector.shape_cast %55 : vector<1x4x4x64xf32> to vector<4x4x64xf32>
    %57 = vector.shape_cast %54 : vector<4x4x64xf32> to vector<1x4x4x64xf32>
    tpu.vector_store %arg3[%c0_5, %c0_6, %c0_7, %c0_8], %57 {strides = array<i32>} : memref<1x4x4x64xf32, #tpu.memory_space<vmem>>, vector<1x4x4x64xf32>,
    return
  }
  func.func @transform_0(%arg0: i32, %arg1: i32) -> (i32, i32, i32, i32) {
    %c0_i32 = arith.constant 0 : i32
    %c0_i32_0 = arith.constant 0 : i32
    %c0_i32_1 = arith.constant 0 : i32
    return %arg0, %c0_i32, %c0_i32_0, %arg1 : i32, i32, i32, i32
  }
  func.func @transform_1(%arg0: i32, %arg1: i32) -> (i32, i32, i32, i32) {
    %c0_i32 = arith.constant 0 : i32
    %c0_i32_0 = arith.constant 0 : i32
    %c0_i32_1 = arith.constant 0 : i32
    return %arg0, %c0_i32, %c0_i32_0, %arg1 : i32, i32, i32, i32
  }
}

</mosaic_0001>

<llo_original>
// kernel: tpu_custom_call.1
$region0: #{tpu_custom_call.1}
  #allocation0 [shape = 'u32[]', space=smem, size = 0x4, offset = 0x4, fixed_abs, tag = 'smem constant byte address 0x4 - core index']
  #allocation1 [shape = 'u32[144,128]{1,0:T(1,128)}', space=vmem, size = 0x12000, scoped, tag = 'internal scratch']
  %s0 = inlined_call_operand.hbm [shape: f32[2,4,4,64], index: 0, kind: input, shape index: {}]
  %s1 = inlined_call_operand.hbm [shape: f32[2,4,4,64], index: 1, kind: output, shape index: {}]
  %s2 = sld [smem:[#allocation0]]
  $region41: #{tpu_custom_call.1} parent=0
    _
  %s4 = ssub.s32 1, %s2
  %s5 = scalar_select 0, %s4, %s2
  $region1: #{tpu_custom_call.1} parent=0
    #allocation2 [shape = 'u8[16384]{0}', space=vmem, size = 0x4000, scoped, tag = 'input window, operand 0']
    #allocation3 [shape = 's32[2]{0}', space=sflag, size = 0x8, scoped, tag = 'scoped memory for tpu_custom_call.1']
    #allocation4 [shape = 's32[2]{0}', space=sflag, size = 0x8, scoped, tag = 'scoped memory for tpu_custom_call.1']
    #allocation5 [shape = 'u8[16384]{0}', space=vmem, size = 0x4000, scoped, tag = 'output window, operand 0']
    %6 = vsyncpa [#allocation3], 0
    %s7 = scalar_lea.sflag [#allocation3], 1
    %8 = vsyncpa %s7, 0
    %9 = vsyncpa [#allocation4], 0
    %s10 = scalar_lea.sflag [#allocation4], 1
    %11 = vsyncpa %s10, 0
    loop: start=0, step=1, limit=4
    $region2: #{tpu_custom_call.1} parent=1 // loop_pre_header
      _
    $region3: #{tpu_custom_call.1} parent=1 // loop_header
      %s13 = sphi 0, %s17
      %p14 = scmp.ge.s32.totalorder %s13, 4
      %s20 = sphi 0, %s32
      %s21 = sphi 0, %s28
      %s22 = sphi 0, %s20
      %s23 = sphi 0, %s21
      %s24 = sphi 0, %s22
      %s25 = sphi 0, %s23
      %s37 = sphi 0, %s39
      %s40 = sphi 0, %s37
      %s41 = sphi 0, %s40
      %s57 = sphi 0, %s41
      %s65 = sphi 0, %s67
      %s68 = sphi 0, %s65
      %s69 = sphi 0, %s68
      %s85 = sphi 0, %s69
    $region4: #{tpu_custom_call.1} parent=1 // loop_header_branch
      %16 = sbr.rel (%p14) target = $region8
    $region5: #{tpu_custom_call.1} parent=1 // loop_body
      %s18 = ssub.s32 %s13, 1
      %s19 = ssub.s32 %s13, 2
      %s26 = sadd.s32 1, %s21
      %p27 = scmp.ge.s32.totalorder %s26, 1
      %s28 = scalar_select %p27, 0, %s26
      %s29 = sadd.s32 1, %s20
      %s30 = scalar_select %p27, %s29, %s20
      %p31 = scmp.ge.s32.totalorder %s30, 2
      %s32 = scalar_select %p31, 0, %s30
      %s33 = ssub.s32 %s20, %s32
      %s34 = ssub.s32 %s21, %s28
      %s35 = sor.u32 %s33, %s34
      %p36 = scmp.eq.s32.totalorder %s35, 0
      %s38 = sadd.s32 %s37, 1
      %s39 = scalar_select %p36, %s37, %s38
      %p42 = pneg %p36
      %p43 = scmp.eq.s32.totalorder %s13, 1
      %p44 = por %p42, %p43
      %p45 = scmp.ne.s32.totalorder %s37, %s40
      %p46 = scmp.eq.s32.totalorder %s13, 0
      %p47 = por %p45, %p46
      %p48 = scmp.ne.s32.totalorder %s37, %s40
      %p49 = scmp.eq.s32.totalorder %s18, 1
      %p50 = por %p48, %p49
      %p51 = scmp.ne.s32.totalorder %s40, %s41
      %p52 = scmp.eq.s32.totalorder %s18, 0
      %p53 = por %p51, %p52
      %p54 = scmp.ne.s32.totalorder %s40, %s41
      %p55 = scmp.eq.s32.totalorder %s19, 1
      %p56 = por %p54, %p55
      %p58 = scmp.ne.s32.totalorder %s41, %s57
      %p59 = scmp.eq.s32.totalorder %s19, 0
      %p60 = por %p58, %p59
      %s61 = ssub.s32 %s20, %s32
      %s62 = ssub.s32 %s21, %s28
      %s63 = sor.u32 %s61, %s62
      %p64 = scmp.eq.s32.totalorder %s63, 0
      %s66 = sadd.s32 %s65, 1
      %s67 = scalar_select %p64, %s65, %s66
      %p70 = pneg %p64
      %p71 = scmp.eq.s32.totalorder %s13, 1
      %p72 = por %p70, %p71
      %p73 = scmp.ne.s32.totalorder %s65, %s68
      %p74 = scmp.eq.s32.totalorder %s13, 0
      %p75 = por %p73, %p74
      %p76 = scmp.ne.s32.totalorder %s65, %s68
      %p77 = scmp.eq.s32.totalorder %s18, 1
      %p78 = por %p76, %p77
      %p79 = scmp.ne.s32.totalorder %s68, %s69
      %p80 = scmp.eq.s32.totalorder %s18, 0
      %p81 = por %p79, %p80
      %p82 = scmp.ne.s32.totalorder %s68, %s69
      %p83 = scmp.eq.s32.totalorder %s19, 1
      %p84 = por %p82, %p83
      %p86 = scmp.ne.s32.totalorder %s69, %s85
      %p87 = scmp.eq.s32.totalorder %s19, 0
      %p88 = por %p86, %p87
      %p89 = scmp.le.s32.totalorder 1, %s13
      %p90 = scmp.lt.s32.totalorder %s13, 3
      %p91 = pnand %p89, %p90
      %p92 = pneg %p91
      // Predicated region
      $region9: #{tpu_custom_call.1} parent=5 // pred_check
        _
      $region10: #{tpu_custom_call.1} parent=5 // pred_check_branch
        %94 = sbr.rel (%p91) target = $region12
      $region11: #{tpu_custom_call.1} parent=5 // pred_region
        %s95 = ssub.s32 %s13, 1
      $region12: #{tpu_custom_call.1} parent=5 // pred_fallthru
        _
      %p96 = scmp.lt.s32.totalorder %s13, 2
      // Predicated region
      $region13: #{tpu_custom_call.1} parent=5 // pred_check
        %p97 = pneg %p96
      $region14: #{tpu_custom_call.1} parent=5 // pred_check_branch
        %99 = sbr.rel (%p97) target = $region16
      $region15: #{tpu_custom_call.1} parent=5 // pred_region
        // Predicated region
        $region17: #{tpu_custom_call.1} parent=15 // pred_check
          %p100 = pneg %p47
        $region18: #{tpu_custom_call.1} parent=15 // pred_check_branch
          %102 = sbr.rel (%p100) target = $region20
        $region19: #{tpu_custom_call.1} parent=15 // pred_region
          %s103 = sand.u32 %s37, 1
          %s104 = scalar_lea.sflag [#allocation3], %s103
          %s105 = sand.u32 %s37, 1
          %s106 = smul.addr %s105, 16
          %s107 = scalar_lea.vmem [#allocation2], %s106
          %s109 = ssub.s32 256, 256
          %110 = vsyncadd %s104, %s109
          %s111 = smul.addr %s20, 4
          %s112 = sadd.s32 %s21, %s111
          %s113 = smul.addr %s112, 64
          %s114 = scalar_lea.hbm %s0, %s113
          %s115 = sshll.u32 %s107, 4
          %s116 = int_to_ptr.vmem [resolvable:$true] %s115
          %121 = dma.hbm_to_vmem [thread:$0]  %s114, 256, %s116, %s104, 64, 64, 4
        $region20: #{tpu_custom_call.1} parent=15 // pred_fallthru
          _
      $region16: #{tpu_custom_call.1} parent=5 // pred_fallthru
        _
      %p122 = scmp.le.s32.totalorder 1, %s13
      %p123 = scmp.lt.s32.totalorder %s13, 3
      %p124 = pnand %p122, %p123
      %p125 = pneg %p124
      // Predicated region
      $region21: #{tpu_custom_call.1} parent=5 // pred_check
        _
      $region22: #{tpu_custom_call.1} parent=5 // pred_check_branch
        %127 = sbr.rel (%p124) target = $region24
      $region23: #{tpu_custom_call.1} parent=5 // pred_region
        %s128 = ssub.s32 %s13, 1
        %s129 = sand.u32 %s40, 1
        %s130 = scalar_lea.sflag [#allocation3], %s129
        %s131 = sand.u32 %s40, 1
        %s132 = smul.addr %s131, 16
        %s133 = scalar_lea.vmem [#allocation2], %s132
        // Predicated region
        $region25: #{tpu_custom_call.1} parent=23 // pred_check
          %p134 = pneg %p53
        $region26: #{tpu_custom_call.1} parent=23 // pred_check_branch
          %136 = sbr.rel (%p134) target = $region28
        $region27: #{tpu_custom_call.1} parent=23 // pred_region
          %137 = dma.done %s130, 256
        $region28: #{tpu_custom_call.1} parent=23 // pred_fallthru
          _
        %s138 = sand.u32 %s40, 1
        %s139 = scalar_lea.sflag [#allocation3], %s138
        %s140 = sand.u32 %s40, 1
        %s141 = smul.addr %s140, 16
        %s142 = scalar_lea.vmem [#allocation2], %s141
        %p143 = pneg %p53
        %p144 = pneg %p50
        %p145 = pneg %p81
        %p146 = pneg %p78
        %s147 = sand.u32 %s68, 1
        %s148 = scalar_lea.sflag [#allocation4], %s147
        %s149 = sand.u32 %s68, 1
        %s150 = smul.addr %s149, 16
        %s151 = scalar_lea.vmem [#allocation5], %s150
        %v152 = vld [vmem:[%s133] sm:$0xf]
        %v153 = vld [vmem:[%s133 + $0x4] sm:$0xf]
        %v154 = vld [vmem:[%s133 + $0x8] sm:$0xf]
        %v155 = vld [vmem:[%s133 + $0xc] sm:$0xf]
        %vm156 = vcmask 519168
        %v157 = vsel %vm156, %v152, -inf
        %v158 = vrot.slane %v157, 4
        %v159 = vmax.f32 %v157, %v158
        %v160 = vrot.slane %v159, 2
        %v161 = vmax.f32 %v159, %v160
        %v162 = vrot.slane %v161, 1
        %v163 = vmax.f32 %v161, %v162
        %v164 = vsel %vm156, %v153, -inf
        %v165 = vrot.slane %v164, 4
        %v166 = vmax.f32 %v164, %v165
        %v167 = vrot.slane %v166, 2
        %v168 = vmax.f32 %v166, %v167
        %v169 = vrot.slane %v168, 1
        %v170 = vmax.f32 %v168, %v169
        %v171 = vsel %vm156, %v154, -inf
        %v172 = vrot.slane %v171, 4
        %v173 = vmax.f32 %v171, %v172
        %v174 = vrot.slane %v173, 2
        %v175 = vmax.f32 %v173, %v174
        %v176 = vrot.slane %v175, 1
        %v177 = vmax.f32 %v175, %v176
        %v178 = vsel %vm156, %v155, -inf
        %v179 = vrot.slane %v178, 4
        %v180 = vmax.f32 %v178, %v179
        %v181 = vrot.slane %v180, 2
        %v182 = vmax.f32 %v180, %v181
        %v183 = vrot.slane %v182, 1
        %v184 = vmax.f32 %v182, %v183
        %v185 = vlaneseq
        %v186 = vshrl.u32 %v185, 7
        %vm187 = vcmp.eq.f32.partialorder %v152, %v163
        %vm188 = vcmp.eq.f32.partialorder %v153, %v170
        %vm189 = vcmp.eq.f32.partialorder %v154, %v177
        %vm190 = vcmp.eq.f32.partialorder %v155, %v184
        %v191 = vsel %vm187, %v186, 4
        %v192 = vsel %vm188, %v186, 4
        %v193 = vsel %vm189, %v186, 4
        %v194 = vsel %vm190, %v186, 4
        %v195 = vsel %vm156, %v191, 2147483647
        %v196 = vrot.slane %v195, 4
        %vm197 = vcmp.lt.s32.totalorder %v195, %v196
        %v198 = vsel %vm197, %v195, %v196
        %v199 = vrot.slane %v198, 2
        %vm200 = vcmp.lt.s32.totalorder %v198, %v199
        %v201 = vsel %vm200, %v198, %v199
        %v202 = vrot.slane %v201, 1
        %vm203 = vcmp.lt.s32.totalorder %v201, %v202
        %v204 = vsel %vm203, %v201, %v202
        %v205 = vsel %vm156, %v192, 2147483647
        %v206 = vrot.slane %v205, 4
        %vm207 = vcmp.lt.s32.totalorder %v205, %v206
        %v208 = vsel %vm207, %v205, %v206
        %v209 = vrot.slane %v208, 2
        %vm210 = vcmp.lt.s32.totalorder %v208, %v209
        %v211 = vsel %vm210, %v208, %v209
        %v212 = vrot.slane %v211, 1
        %vm213 = vcmp.lt.s32.totalorder %v211, %v212
        %v214 = vsel %vm213, %v211, %v212
        %v215 = vsel %vm156, %v193, 2147483647
        %v216 = vrot.slane %v215, 4
        %vm217 = vcmp.lt.s32.totalorder %v215, %v216
        %v218 = vsel %vm217, %v215, %v216
        %v219 = vrot.slane %v218, 2
        %vm220 = vcmp.lt.s32.totalorder %v218, %v219
        %v221 = vsel %vm220, %v218, %v219
        %v222 = vrot.slane %v221, 1
        %vm223 = vcmp.lt.s32.totalorder %v221, %v222
        %v224 = vsel %vm223, %v221, %v222
        %v225 = vsel %vm156, %v194, 2147483647
        %v226 = vrot.slane %v225, 4
        %vm227 = vcmp.lt.s32.totalorder %v225, %v226
        %v228 = vsel %vm227, %v225, %v226
        %v229 = vrot.slane %v228, 2
        %vm230 = vcmp.lt.s32.totalorder %v228, %v229
        %v231 = vsel %vm230, %v228, %v229
        %v232 = vrot.slane %v231, 1
        %vm233 = vcmp.lt.s32.totalorder %v231, %v232
        %v234 = vsel %vm233, %v231, %v232
        %vm235 = vcmp.eq.s32.totalorder %v204, 0
        %vm236 = vcmp.eq.s32.totalorder %v214, 0
        %vm237 = vcmp.eq.s32.totalorder %v224, 0
        %vm238 = vcmp.eq.s32.totalorder %v234, 0
        %v239 = vsel %vm235, 1, 0
        %v240 = vsel %vm236, 1, 0
        %v241 = vsel %vm237, 1, 0
        %v242 = vsel %vm238, 1, 0
        %vm243 = vcmp.eq.s32.totalorder %v239, 1
        %vm244 = vcmp.eq.s32.totalorder %v240, 1
        %vm245 = vcmp.eq.s32.totalorder %v241, 1
        %vm246 = vcmp.eq.s32.totalorder %v242, 1
        %v251 = vrot.slane %v153, 7
        %vm252 = vcmask 1041409
        %v253 = vsel %vm252, %v251, %v152
        %v254 = vrot.slane %v154, 6
        %vm255 = vcmask 1042434
        %v256 = vsel %vm255, %v254, %v253
        %v257 = vrot.slane %v155, 5
        %vm258 = vcmask 1043459
        %v259 = vsel %vm258, %v257, %v256
        %v261 = vsel %vm243, %v259, 0.0
        %v262 = vsel %vm244, %v259, 0.0
        %v263 = vsel %vm245, %v259, 0.0
        %v264 = vsel %vm246, %v259, 0.0
        %vm265 = vcmp.eq.s32.totalorder %v204, 1
        %vm266 = vcmp.eq.s32.totalorder %v214, 1
        %vm267 = vcmp.eq.s32.totalorder %v224, 1
        %vm268 = vcmp.eq.s32.totalorder %v234, 1
        %v269 = vsel %vm265, 1, 0
        %v270 = vsel %vm266, 1, 0
        %v271 = vsel %vm267, 1, 0
        %v272 = vsel %vm268, 1, 0
        %vm273 = vcmp.eq.s32.totalorder %v269, 1
        %vm274 = vcmp.eq.s32.totalorder %v270, 1
        %vm275 = vcmp.eq.s32.totalorder %v271, 1
        %vm276 = vcmp.eq.s32.totalorder %v272, 1
        %v277 = vrot.slane %v152, 1
        %v278 = vsel %vm252, %v153, %v277
        %v279 = vrot.slane %v154, 7
        %v280 = vsel %vm255, %v279, %v278
        %v281 = vrot.slane %v155, 6
        %v282 = vsel %vm258, %v281, %v280
        %v284 = vsel %vm273, %v282, %v261
        %v285 = vsel %vm274, %v282, %v262
        %v286 = vsel %vm275, %v282, %v263
        %v287 = vsel %vm276, %v282, %v264
        %vm288 = vcmp.eq.s32.totalorder %v204, 2
        %vm289 = vcmp.eq.s32.totalorder %v214, 2
        %vm290 = vcmp.eq.s32.totalorder %v224, 2
        %vm291 = vcmp.eq.s32.totalorder %v234, 2
        %v292 = vsel %vm288, 1, 0
        %v293 = vsel %vm289, 1, 0
        %v294 = vsel %vm290, 1, 0
        %v295 = vsel %vm291, 1, 0
        %vm296 = vcmp.eq.s32.totalorder %v292, 1
        %vm297 = vcmp.eq.s32.totalorder %v293, 1
        %vm298 = vcmp.eq.s32.totalorder %v294, 1
        %vm299 = vcmp.eq.s32.totalorder %v295, 1
        %v300 = vrot.slane %v152, 2
        %v301 = vrot.slane %v153, 1
        %v302 = vsel %vm252, %v301, %v300
        %v303 = vsel %vm255, %v154, %v302
        %v304 = vrot.slane %v155, 7
        %v305 = vsel %vm258, %v304, %v303
        %v307 = vsel %vm296, %v305, %v284
        %v308 = vsel %vm297, %v305, %v285
        %v309 = vsel %vm298, %v305, %v286
        %v310 = vsel %vm299, %v305, %v287
        %vm311 = vcmp.eq.s32.totalorder %v204, 3
        %vm312 = vcmp.eq.s32.totalorder %v214, 3
        %vm313 = vcmp.eq.s32.totalorder %v224, 3
        %vm314 = vcmp.eq.s32.totalorder %v234, 3
        %v315 = vsel %vm311, 1, 0
        %v316 = vsel %vm312, 1, 0
        %v317 = vsel %vm313, 1, 0
        %v318 = vsel %vm314, 1, 0
        %vm319 = vcmp.eq.s32.totalorder %v315, 1
        %vm320 = vcmp.eq.s32.totalorder %v316, 1
        %vm321 = vcmp.eq.s32.totalorder %v317, 1
        %vm322 = vcmp.eq.s32.totalorder %v318, 1
        %v323 = vrot.slane %v152, 3
        %v324 = vrot.slane %v153, 2
        %v325 = vsel %vm252, %v324, %v323
        %v326 = vrot.slane %v154, 1
        %v327 = vsel %vm255, %v326, %v325
        %v328 = vsel %vm258, %v155, %v327
        %v330 = vsel %vm319, %v328, %v307
        %v331 = vsel %vm320, %v328, %v308
        %v332 = vsel %vm321, %v328, %v309
        %v333 = vsel %vm322, %v328, %v310
        %334 = vst.msk [vmem:[%s151] sm:$0xf] %vm156, %v330
        %335 = vst.msk [vmem:[%s151 + $0x4] sm:$0xf] %vm156, %v331
        %336 = vst.msk [vmem:[%s151 + $0x8] sm:$0xf] %vm156, %v332
        %337 = vst.msk [vmem:[%s151 + $0xc] sm:$0xf] %vm156, %v333
        %s338 = sand.u32 %s68, 1
        %s339 = scalar_lea.sflag [#allocation4], %s338
        %s340 = sand.u32 %s68, 1
        %s341 = smul.addr %s340, 16
        %s342 = scalar_lea.vmem [#allocation5], %s341
        // Predicated region
        $region29: #{tpu_custom_call.1} parent=23 // pred_check
          %p343 = pneg %p78
        $region30: #{tpu_custom_call.1} parent=23 // pred_check_branch
          %345 = sbr.rel (%p343) target = $region32
        $region31: #{tpu_custom_call.1} parent=23 // pred_region
          %s347 = ssub.s32 256, 256
          %348 = vsyncadd %s339, %s347
          %s349 = smul.addr %s22, 4
          %s350 = sadd.s32 %s23, %s349
          %s351 = smul.addr %s350, 64
          %s352 = scalar_lea.hbm %s1, %s351
          %s353 = sshll.u32 %s342, 4
          %s354 = int_to_ptr.vmem [resolvable:$true] %s353
          %359 = dma.vmem_to_hbm [thread:$0]  %s354, 256, %s352, %s339, 64, 64, 4
        $region32: #{tpu_custom_call.1} parent=23 // pred_fallthru
          _
      $region24: #{tpu_custom_call.1} parent=5 // pred_fallthru
        _
      %p360 = scmp.le.s32.totalorder 2, %s13
      // Predicated region
      $region33: #{tpu_custom_call.1} parent=5 // pred_check
        %p361 = pneg %p360
      $region34: #{tpu_custom_call.1} parent=5 // pred_check_branch
        %363 = sbr.rel (%p361) target = $region36
      $region35: #{tpu_custom_call.1} parent=5 // pred_region
        %s364 = ssub.s32 %s13, 2
        // Predicated region
        $region37: #{tpu_custom_call.1} parent=35 // pred_check
          %p365 = pneg %p84
        $region38: #{tpu_custom_call.1} parent=35 // pred_check_branch
          %367 = sbr.rel (%p365) target = $region40
        $region39: #{tpu_custom_call.1} parent=35 // pred_region
          %s368 = sand.u32 %s69, 1
          %s369 = scalar_lea.sflag [#allocation4], %s368
          %s370 = sand.u32 %s69, 1
          %s371 = smul.addr %s370, 16
          %s372 = scalar_lea.vmem [#allocation5], %s371
          %373 = dma.done %s369, 256
        $region40: #{tpu_custom_call.1} parent=35 // pred_fallthru
          _
      $region36: #{tpu_custom_call.1} parent=5 // pred_fallthru
        _
    $region6: #{tpu_custom_call.1} parent=1 // loop_footer
      %s17 = sadd.s32 1, %s13
    $region7: #{tpu_custom_call.1} parent=1 // loop_footer_branch
      %12 = sbr.rel target = $region3
    $region8: #{tpu_custom_call.1} parent=1 // loop_exit
      _
    %374 = vsyncpa [#allocation3], 1
    %s375 = scalar_lea.sflag [#allocation3], 1
    %376 = vsyncpa %s375, 1
    %377 = vsyncpa [#allocation4], 1
    %s378 = scalar_lea.sflag [#allocation4], 1
    %379 = vsyncpa %s378, 1

</llo_original>
